<compile_context>
chip_gen: v7x
topology: tpu7x:2x2x1
jax: 0.10.0
libtpu: 0.0.40
codegen_flags: <defaults>
</compile_context>

<pallas_src>
import jax
import jax.numpy as jnp
from jax.experimental import pallas as pl
from jax.experimental.pallas import tpu as pltpu

# ----------------------------- config ---------------------------------------
B, C, H, W = 2, 4, 16, 16          # input shape (NCHW)
D = C * H * W                      # flattened feature dim = 1024
NUM_CLASSES = 8                    # detection logits per image
NUM_BOX = 4                        # bbox coords per image
N_TOT = NUM_CLASSES + NUM_BOX      # fused det|box lane width per member
NUM_MODELS = 3                     # ensemble size

DETECTION_WEIGHTS = [0.5, 0.3, 0.2]
BBOX_WEIGHTS = [1.0, 2.0, 3.0]


# ----------------------------- kernel ---------------------------------------
def _make_ensemble_kernel(det_weights, box_weights, num_classes, num_box):
    """Build a kernel with the ensemble weights / normalizers baked in as
    Python literals (no constant tensor inputs, no runtime divide)."""
    n_tot = num_classes + num_box
    num_models = len(det_weights)
    det_sum = float(sum(det_weights))
    box_sum = float(sum(box_weights))
    det_scales = [float(w) / det_sum for w in det_weights]   # w_m / sum(w)
    box_scales = [float(w) / box_sum for w in box_weights]

    def kernel(x_ref,      # (B, D)            f32 VMEM
               w_ref,      # (D, M*N_TOT)      f32 VMEM  (members lane-concat)
               b_ref,      # (1, M*N_TOT)      f32 VMEM
               out_ref):   # (B, N_TOT)        f32 VMEM  (det | box fused)
        # Single MXU matmul for all members and both heads.
        y = jnp.dot(x_ref[...], w_ref[...],
                    preferred_element_type=jnp.float32)       # (B, M*N_TOT)
        y = y + b_ref[...]                                    # per-member bias
        # Member-weighted reduction over the tiny post-matmul slab:
        # static lane slices + scalar-literal scales (VPU, ~1 vreg of work).
        det = det_scales[0] * y[:, 0:num_classes]
        box = box_scales[0] * y[:, num_classes:n_tot]
        for m in range(1, num_models):
            off = m * n_tot
            det = det + det_scales[m] * y[:, off:off + num_classes]
            box = box + box_scales[m] * y[:, off + num_classes:off + n_tot]
        out_ref[...] = jnp.concatenate([det, box], axis=1).astype(out_ref.dtype)

    return kernel


# ----------------------------- weight prep (one-time) ------------------------
def prepare_ensemble_params(wd, wb, bd, bb):
    """One-time layout fusion, hoisted out of the per-forward path.
       wd: (M, D, NUM_CLASSES), wb: (M, D, NUM_BOX),
       bd: (M, NUM_CLASSES),    bb: (M, NUM_BOX).
       Returns W_lanes (D, M*N_TOT) and b_lanes (1, M*N_TOT), where member m
       occupies lanes [m*N_TOT, (m+1)*N_TOT) laid out as [det | box]."""
    m, d, n_det = wd.shape
    n_box = wb.shape[2]
    n_tot = n_det + n_box
    w_member = jnp.concatenate([wd, wb], axis=2)               # (M, D, N_TOT)
    w_lanes = jnp.transpose(w_member, (1, 0, 2)).reshape(d, m * n_tot)
    b_member = jnp.concatenate([bd, bb], axis=1)               # (M, N_TOT)
    b_lanes = b_member.reshape(1, m * n_tot)
    return w_lanes, b_lanes


# ----------------------------- forward ---------------------------------------
def weighted_ensemble_forward(x_nchw, w_lanes, b_lanes,
                              det_weights, box_weights,
                              num_classes=NUM_CLASSES, num_box=NUM_BOX):
    b = x_nchw.shape[0]
    x_flat = x_nchw.reshape(b, -1)                 # (B, D) glue reshape
    n_tot = num_classes + num_box

    kernel = _make_ensemble_kernel(det_weights, box_weights, num_classes, num_box)

    out = pl.pallas_call(
        kernel,
        out_shape=jax.ShapeDtypeStruct((b, n_tot), jnp.float32),
        # Single invocation, whole (padded) operands resident in VMEM:
        # 32 KiB (x) + 512 KiB (W_lanes, lane-padded 36->128) + <8 KiB rest.
        in_specs=[pl.BlockSpec(memory_space=pltpu.MemorySpace.VMEM)] * 3,
        out_specs=pl.BlockSpec(memory_space=pltpu.MemorySpace.VMEM),
    )(x_flat, w_lanes, b_lanes)

    # Split the fused lane-dense output slab back into (detect, bbox).
    return out[:, :num_classes], out[:, num_classes:]


# ----------------------------- reference -------------------------------------
def reference_forward(x_nchw, wd, wb, bd, bb, det_weights, box_weights):
    x_flat = x_nchw.reshape(x_nchw.shape[0], -1)
    det_outs, box_outs = [], []
    for i in range(wd.shape[0]):
        det = x_flat @ wd[i] + bd[i]
        box = x_flat @ wb[i] + bb[i]
        det_outs.append(det * det_weights[i])
        box_outs.append(box * box_weights[i])
    sum_det = jnp.stack(det_outs, 0).sum(0)
    sum_box = jnp.stack(box_outs, 0).sum(0)
    return sum_det / sum(det_weights), sum_box / sum(box_weights)


# ----------------------------- main -------------------------------------------
if __name__ == "__main__":
    key = jax.random.PRNGKey(0)
    kx, kwd, kwb, kbd, kbb = jax.random.split(key, 5)

    x = jax.random.normal(kx, (B, C, H, W), dtype=jnp.float32)
    wd = jax.random.normal(kwd, (NUM_MODELS, D, NUM_CLASSES), dtype=jnp.float32) * 0.02
    wb = jax.random.normal(kwb, (NUM_MODELS, D, NUM_BOX), dtype=jnp.float32) * 0.02
    bd = jax.random.normal(kbd, (NUM_MODELS, NUM_CLASSES), dtype=jnp.float32) * 0.1
    bb = jax.random.normal(kbb, (NUM_MODELS, NUM_BOX), dtype=jnp.float32) * 0.1

    # One-time weight layout fusion (would live at model init in real code).
    w_lanes, b_lanes = prepare_ensemble_params(wd, wb, bd, bb)
    w_lanes, b_lanes = jax.block_until_ready((w_lanes, b_lanes))

    det_out, box_out = weighted_ensemble_forward(
        x, w_lanes, b_lanes, DETECTION_WEIGHTS, BBOX_WEIGHTS)
    jax.block_until_ready((det_out, box_out))

    det_ref, box_ref = reference_forward(
        x, wd, wb, bd, bb, DETECTION_WEIGHTS, BBOX_WEIGHTS)

    assert det_out.shape == (B, NUM_CLASSES) and box_out.shape == (B, NUM_BOX)
    assert jnp.allclose(det_out, det_ref, atol=1e-4, rtol=1e-4)
    assert jnp.allclose(box_out, box_ref, atol=1e-4, rtol=1e-4)
    print("KERNEL_OK")
</pallas_src>

<mosaic_0001>
module attributes {stable_mosaic.version = 11 : i64} {
  func.func @kernel(%arg0: memref<2x1024xf32, #tpu.memory_space<vmem>>, %arg1: memref<1024x36xf32, #tpu.memory_space<vmem>>, %arg2: memref<1x36xf32, #tpu.memory_space<vmem>>, %arg3: memref<2x12xf32, #tpu.memory_space<vmem>>) attributes {dimension_semantics = [], scalar_prefetch = 0 : i64, scratch_operands = 0 : i64, tpu.core_type = #tpu.core_type<tc>} {
    %c0 = arith.constant 0 : index
    %c0_0 = arith.constant 0 : index
    %0 = vector.load %arg0[%c0, %c0_0] : memref<2x1024xf32, #tpu.memory_space<vmem>>, vector<2x1024xf32>
    %c0_1 = arith.constant 0 : index
    %c0_2 = arith.constant 0 : index
    %1 = vector.load %arg1[%c0_1, %c0_2] : memref<1024x36xf32, #tpu.memory_space<vmem>>, vector<1024x36xf32>
    %cst = arith.constant dense<0.000000e+00> : vector<2x36xf32>
    %2 = tpu.matmul %0, %1, %cst {dimension_numbers = #tpu.dot_dimension_numbers<[1], [0], [0], [1], [0, 0, 1, 1], [], []>} : vector<2x1024xf32>, vector<1024x36xf32>, vector<2x36xf32> -> vector<2x36xf32>
    %c0_3 = arith.constant 0 : index
    %c0_4 = arith.constant 0 : index
    %3 = vector.load %arg2[%c0_3, %c0_4] : memref<1x36xf32, #tpu.memory_space<vmem>>, vector<1x36xf32>
    %4 = vector.broadcast %3 : vector<1x36xf32> to vector<2x36xf32>
    %5 = arith.addf %2, %4 : vector<2x36xf32>
    %6 = vector.extract_strided_slice %5 {offsets = [0, 0], sizes = [2, 8], strides = [1, 1]} : vector<2x36xf32> to vector<2x8xf32>
    %cst_5 = arith.constant 5.000000e-01 : f32
    %7 = vector.broadcast %cst_5 : f32 to vector<2x8xf32>
    %8 = arith.mulf %7, %6 : vector<2x8xf32>
    %9 = vector.extract_strided_slice %5 {offsets = [0, 8], sizes = [2, 4], strides = [1, 1]} : vector<2x36xf32> to vector<2x4xf32>
    %cst_6 = arith.constant 0.166666672 : f32
    %10 = vector.broadcast %cst_6 : f32 to vector<2x4xf32>
    %11 = arith.mulf %10, %9 : vector<2x4xf32>
    %12 = vector.extract_strided_slice %5 {offsets = [0, 12], sizes = [2, 8], strides = [1, 1]} : vector<2x36xf32> to vector<2x8xf32>
    %cst_7 = arith.constant 3.000000e-01 : f32
    %13 = vector.broadcast %cst_7 : f32 to vector<2x8xf32>
    %14 = arith.mulf %13, %12 : vector<2x8xf32>
    %15 = arith.addf %8, %14 : vector<2x8xf32>
    %16 = vector.extract_strided_slice %5 {offsets = [0, 20], sizes = [2, 4], strides = [1, 1]} : vector<2x36xf32> to vector<2x4xf32>
    %cst_8 = arith.constant 0.333333343 : f32
    %17 = vector.broadcast %cst_8 : f32 to vector<2x4xf32>
    %18 = arith.mulf %17, %16 : vector<2x4xf32>
    %19 = arith.addf %11, %18 : vector<2x4xf32>
    %20 = vector.extract_strided_slice %5 {offsets = [0, 24], sizes = [2, 8], strides = [1, 1]} : vector<2x36xf32> to vector<2x8xf32>
    %cst_9 = arith.constant 2.000000e-01 : f32
    %21 = vector.broadcast %cst_9 : f32 to vector<2x8xf32>
    %22 = arith.mulf %21, %20 : vector<2x8xf32>
    %23 = arith.addf %15, %22 : vector<2x8xf32>
    %24 = vector.extract_strided_slice %5 {offsets = [0, 32], sizes = [2, 4], strides = [1, 1]} : vector<2x36xf32> to vector<2x4xf32>
    %cst_10 = arith.constant 5.000000e-01 : f32
    %25 = vector.broadcast %cst_10 : f32 to vector<2x4xf32>
    %26 = arith.mulf %25, %24 : vector<2x4xf32>
    %27 = arith.addf %19, %26 : vector<2x4xf32>
    %28 = tpu.concatenate %23, %27 in 1 : vector<2x8xf32>, vector<2x4xf32> -> vector<2x12xf32>
    %c0_11 = arith.constant 0 : index
    %c0_12 = arith.constant 0 : index
    %29 = vector.load %arg3[%c0_11, %c0_12] : memref<2x12xf32, #tpu.memory_space<vmem>>, vector<2x12xf32>
    tpu.vector_store %arg3[%c0_11, %c0_12], %28 {strides = array<i32>} : memref<2x12xf32, #tpu.memory_space<vmem>>, vector<2x12xf32>,
    return
  }
}

</mosaic_0001>

<llo_original>
// kernel: tpu_custom_call.1
$region0: #{tpu_custom_call.1}
  #allocation0 [shape = 'u32[]', space=smem, size = 0x4, offset = 0x4, fixed_abs, tag = 'smem constant byte address 0x4 - core index']
  #allocation1 [shape = 'u32[144,128]{1,0:T(1,128)}', space=vmem, size = 0x12000, scoped, tag = 'internal scratch']
  %s0 = inlined_call_operand.vmem [shape: f32[2,1024], index: 0, kind: input, shape index: {}]
  %s1 = inlined_call_operand.vmem [shape: f32[1024,36], index: 1, kind: input, shape index: {}]
  %s2 = inlined_call_operand.vmem [shape: f32[1,36], index: 2, kind: input, shape index: {}]
  %s3 = inlined_call_operand.hbm [shape: f32[2,12], index: 3, kind: output, shape index: {}]
  %s4 = sld [smem:[#allocation0]]
  $region22: #{tpu_custom_call.1} parent=0
    _
  %s6 = ssub.s32 1, %s4
  %s7 = scalar_select 0, %s6, %s4
  $region1: #{tpu_custom_call.1} parent=0
    #allocation2 [shape = 'u8[1024]{0}', space=vmem, size = 0x400, scoped, tag = 'output window, operand 0, single buffered']
    #allocation3 [shape = 's32[1]{0}', space=sflag, size = 0x4, scoped, tag = 'scoped memory for tpu_custom_call.1']
    %8 = vsyncpa [#allocation3], 0
    // Predicated region
    $region2: #{tpu_custom_call.1} parent=1 // pred_check
      _
    $region3: #{tpu_custom_call.1} parent=1 // pred_check_branch
      %10 = sbr.rel (0) target = $region5
    $region4: #{tpu_custom_call.1} parent=1 // pred_region
      _
    $region5: #{tpu_custom_call.1} parent=1 // pred_fallthru
      _
    // Predicated region
    $region6: #{tpu_custom_call.1} parent=1 // pred_check
      _
    $region7: #{tpu_custom_call.1} parent=1 // pred_check_branch
      %12 = sbr.rel (0) target = $region9
    $region8: #{tpu_custom_call.1} parent=1 // pred_region
      _
    $region9: #{tpu_custom_call.1} parent=1 // pred_fallthru
      _
    // Predicated region
    $region10: #{tpu_custom_call.1} parent=1 // pred_check
      _
    $region11: #{tpu_custom_call.1} parent=1 // pred_check_branch
      %14 = sbr.rel (0) target = $region13
    $region12: #{tpu_custom_call.1} parent=1 // pred_region
      _
    $region13: #{tpu_custom_call.1} parent=1 // pred_fallthru
      _
    %v15 = vld [vmem:[%s0] sm:$0xff]
    %v16 = vld [vmem:[%s0 + $0x8] sm:$0xff]
    %v17 = vld [vmem:[%s1] sm:$0xff]
    %v18 = vld [vmem:[%s1 + $0x8] sm:$0xff]
    %v19 = vld [vmem:[%s1 + $0x10] sm:$0xff]
    %v20 = vld [vmem:[%s1 + $0x18] sm:$0xff]
    %v21 = vld [vmem:[%s1 + $0x20] sm:$0xff]
    %v22 = vld [vmem:[%s1 + $0x28] sm:$0xff]
    %v23 = vld [vmem:[%s1 + $0x30] sm:$0xff]
    %v24 = vld [vmem:[%s1 + $0x38] sm:$0xff]
    %v25 = vld [vmem:[%s1 + $0x40] sm:$0xff]
    %v26 = vld [vmem:[%s1 + $0x48] sm:$0xff]
    %v27 = vld [vmem:[%s1 + $0x50] sm:$0xff]
    %v28 = vld [vmem:[%s1 + $0x58] sm:$0xff]
    %v29 = vld [vmem:[%s1 + $0x60] sm:$0xff]
    %v30 = vld [vmem:[%s1 + $0x68] sm:$0xff]
    %v31 = vld [vmem:[%s1 + $0x70] sm:$0xff]
    %v32 = vld [vmem:[%s1 + $0x78] sm:$0xff]
    %v33 = vld [vmem:[%s1 + $0x80] sm:$0xff]
    %v34 = vld [vmem:[%s1 + $0x88] sm:$0xff]
    %v35 = vld [vmem:[%s1 + $0x90] sm:$0xff]
    %v36 = vld [vmem:[%s1 + $0x98] sm:$0xff]
    %v37 = vld [vmem:[%s1 + $0xa0] sm:$0xff]
    %v38 = vld [vmem:[%s1 + $0xa8] sm:$0xff]
    %v39 = vld [vmem:[%s1 + $0xb0] sm:$0xff]
    %v40 = vld [vmem:[%s1 + $0xb8] sm:$0xff]
    %v41 = vld [vmem:[%s1 + $0xc0] sm:$0xff]
    %v42 = vld [vmem:[%s1 + $0xc8] sm:$0xff]
    %v43 = vld [vmem:[%s1 + $0xd0] sm:$0xff]
    %v44 = vld [vmem:[%s1 + $0xd8] sm:$0xff]
    %v45 = vld [vmem:[%s1 + $0xe0] sm:$0xff]
    %v46 = vld [vmem:[%s1 + $0xe8] sm:$0xff]
    %v47 = vld [vmem:[%s1 + $0xf0] sm:$0xff]
    %v48 = vld [vmem:[%s1 + $0xf8] sm:$0xff]
    %v49 = vld [vmem:[%s1 + $0x100] sm:$0xff]
    %v50 = vld [vmem:[%s1 + $0x108] sm:$0xff]
    %v51 = vld [vmem:[%s1 + $0x110] sm:$0xff]
    %v52 = vld [vmem:[%s1 + $0x118] sm:$0xff]
    %v53 = vld [vmem:[%s1 + $0x120] sm:$0xff]
    %v54 = vld [vmem:[%s1 + $0x128] sm:$0xff]
    %v55 = vld [vmem:[%s1 + $0x130] sm:$0xff]
    %v56 = vld [vmem:[%s1 + $0x138] sm:$0xff]
    %v57 = vld [vmem:[%s1 + $0x140] sm:$0xff]
    %v58 = vld [vmem:[%s1 + $0x148] sm:$0xff]
    %v59 = vld [vmem:[%s1 + $0x150] sm:$0xff]
    %v60 = vld [vmem:[%s1 + $0x158] sm:$0xff]
    %v61 = vld [vmem:[%s1 + $0x160] sm:$0xff]
    %v62 = vld [vmem:[%s1 + $0x168] sm:$0xff]
    %v63 = vld [vmem:[%s1 + $0x170] sm:$0xff]
    %v64 = vld [vmem:[%s1 + $0x178] sm:$0xff]
    %v65 = vld [vmem:[%s1 + $0x180] sm:$0xff]
    %v66 = vld [vmem:[%s1 + $0x188] sm:$0xff]
    %v67 = vld [vmem:[%s1 + $0x190] sm:$0xff]
    %v68 = vld [vmem:[%s1 + $0x198] sm:$0xff]
    %v69 = vld [vmem:[%s1 + $0x1a0] sm:$0xff]
    %v70 = vld [vmem:[%s1 + $0x1a8] sm:$0xff]
    %v71 = vld [vmem:[%s1 + $0x1b0] sm:$0xff]
    %v72 = vld [vmem:[%s1 + $0x1b8] sm:$0xff]
    %v73 = vld [vmem:[%s1 + $0x1c0] sm:$0xff]
    %v74 = vld [vmem:[%s1 + $0x1c8] sm:$0xff]
    %v75 = vld [vmem:[%s1 + $0x1d0] sm:$0xff]
    %v76 = vld [vmem:[%s1 + $0x1d8] sm:$0xff]
    %v77 = vld [vmem:[%s1 + $0x1e0] sm:$0xff]
    %v78 = vld [vmem:[%s1 + $0x1e8] sm:$0xff]
    %v79 = vld [vmem:[%s1 + $0x1f0] sm:$0xff]
    %v80 = vld [vmem:[%s1 + $0x1f8] sm:$0xff]
    %v81 = vld [vmem:[%s1 + $0x200] sm:$0xff]
    %v82 = vld [vmem:[%s1 + $0x208] sm:$0xff]
    %v83 = vld [vmem:[%s1 + $0x210] sm:$0xff]
    %v84 = vld [vmem:[%s1 + $0x218] sm:$0xff]
    %v85 = vld [vmem:[%s1 + $0x220] sm:$0xff]
    %v86 = vld [vmem:[%s1 + $0x228] sm:$0xff]
    %v87 = vld [vmem:[%s1 + $0x230] sm:$0xff]
    %v88 = vld [vmem:[%s1 + $0x238] sm:$0xff]
    %v89 = vld [vmem:[%s1 + $0x240] sm:$0xff]
    %v90 = vld [vmem:[%s1 + $0x248] sm:$0xff]
    %v91 = vld [vmem:[%s1 + $0x250] sm:$0xff]
    %v92 = vld [vmem:[%s1 + $0x258] sm:$0xff]
    %v93 = vld [vmem:[%s1 + $0x260] sm:$0xff]
    %v94 = vld [vmem:[%s1 + $0x268] sm:$0xff]
    %v95 = vld [vmem:[%s1 + $0x270] sm:$0xff]
    %v96 = vld [vmem:[%s1 + $0x278] sm:$0xff]
    %v97 = vld [vmem:[%s1 + $0x280] sm:$0xff]
    %v98 = vld [vmem:[%s1 + $0x288] sm:$0xff]
    %v99 = vld [vmem:[%s1 + $0x290] sm:$0xff]
    %v100 = vld [vmem:[%s1 + $0x298] sm:$0xff]
    %v101 = vld [vmem:[%s1 + $0x2a0] sm:$0xff]
    %v102 = vld [vmem:[%s1 + $0x2a8] sm:$0xff]
    %v103 = vld [vmem:[%s1 + $0x2b0] sm:$0xff]
    %v104 = vld [vmem:[%s1 + $0x2b8] sm:$0xff]
    %v105 = vld [vmem:[%s1 + $0x2c0] sm:$0xff]
    %v106 = vld [vmem:[%s1 + $0x2c8] sm:$0xff]
    %v107 = vld [vmem:[%s1 + $0x2d0] sm:$0xff]
    %v108 = vld [vmem:[%s1 + $0x2d8] sm:$0xff]
    %v109 = vld [vmem:[%s1 + $0x2e0] sm:$0xff]
    %v110 = vld [vmem:[%s1 + $0x2e8] sm:$0xff]
    %v111 = vld [vmem:[%s1 + $0x2f0] sm:$0xff]
    %v112 = vld [vmem:[%s1 + $0x2f8] sm:$0xff]
    %v113 = vld [vmem:[%s1 + $0x300] sm:$0xff]
    %v114 = vld [vmem:[%s1 + $0x308] sm:$0xff]
    %v115 = vld [vmem:[%s1 + $0x310] sm:$0xff]
    %v116 = vld [vmem:[%s1 + $0x318] sm:$0xff]
    %v117 = vld [vmem:[%s1 + $0x320] sm:$0xff]
    %v118 = vld [vmem:[%s1 + $0x328] sm:$0xff]
    %v119 = vld [vmem:[%s1 + $0x330] sm:$0xff]
    %v120 = vld [vmem:[%s1 + $0x338] sm:$0xff]
    %v121 = vld [vmem:[%s1 + $0x340] sm:$0xff]
    %v122 = vld [vmem:[%s1 + $0x348] sm:$0xff]
    %v123 = vld [vmem:[%s1 + $0x350] sm:$0xff]
    %v124 = vld [vmem:[%s1 + $0x358] sm:$0xff]
    %v125 = vld [vmem:[%s1 + $0x360] sm:$0xff]
    %v126 = vld [vmem:[%s1 + $0x368] sm:$0xff]
    %v127 = vld [vmem:[%s1 + $0x370] sm:$0xff]
    %v128 = vld [vmem:[%s1 + $0x378] sm:$0xff]
    %v129 = vld [vmem:[%s1 + $0x380] sm:$0xff]
    %v130 = vld [vmem:[%s1 + $0x388] sm:$0xff]
    %v131 = vld [vmem:[%s1 + $0x390] sm:$0xff]
    %v132 = vld [vmem:[%s1 + $0x398] sm:$0xff]
    %v133 = vld [vmem:[%s1 + $0x3a0] sm:$0xff]
    %v134 = vld [vmem:[%s1 + $0x3a8] sm:$0xff]
    %v135 = vld [vmem:[%s1 + $0x3b0] sm:$0xff]
    %v136 = vld [vmem:[%s1 + $0x3b8] sm:$0xff]
    %v137 = vld [vmem:[%s1 + $0x3c0] sm:$0xff]
    %v138 = vld [vmem:[%s1 + $0x3c8] sm:$0xff]
    %v139 = vld [vmem:[%s1 + $0x3d0] sm:$0xff]
    %v140 = vld [vmem:[%s1 + $0x3d8] sm:$0xff]
    %v141 = vld [vmem:[%s1 + $0x3e0] sm:$0xff]
    %v142 = vld [vmem:[%s1 + $0x3e8] sm:$0xff]
    %v143 = vld [vmem:[%s1 + $0x3f0] sm:$0xff]
    %v144 = vld [vmem:[%s1 + $0x3f8] sm:$0xff]
    %v145 = vld [vmem:[%s2] sm:$0x1]
    %v147 = vlaneseq
    %v148 = vshrl.u32 %v147, 7
    %v149 = vsub.s32 0, %v148
    %v150 = vrot.slane %v145, %v149
    %v154 = vcombine.high %v15, %v15
    %v156 = vunpack.c.l.s4 1983009808
    %v157 = vunpack.c.0.s8 %v156
    %v158 = vlaneseq
    %v159 = vshrl.u32 %v158, 7
    %v160 = vsub.s32 %v157, %v159
    %v161 = vrot.slane %v15, %v160
    %v163 = vunpack.c.l.s4 1983009808
    %v164 = vunpack.c.0.s8 %v163
    %v165 = vlaneseq
    %v166 = vshrl.u32 %v165, 7
    %v167 = vsub.s32 %v164, %v166
    %v168 = vrot.slane %v154, %v167
    %v169 = vcombine.high %v161, %v161
    %v170 = vcombine.high %v168, %v168
    %v171 = vcombine.high %v16, %v16
    %v173 = vunpack.c.l.s4 1983009808
    %v174 = vunpack.c.0.s8 %v173
    %v175 = vlaneseq
    %v176 = vshrl.u32 %v175, 7
    %v177 = vsub.s32 %v174, %v176
    %v178 = vrot.slane %v16, %v177
    %v180 = vunpack.c.l.s4 1983009808
    %v181 = vunpack.c.0.s8 %v180
    %v182 = vlaneseq
    %v183 = vshrl.u32 %v182, 7
    %v184 = vsub.s32 %v181, %v183
    %v185 = vrot.slane %v171, %v184
    %v186 = vcombine.high %v178, %v178
    %v187 = vcombine.high %v185, %v185
    %196 = vmatprep.subr.mxu0 0.0
    %197 = vmatpush1.msra.mxu0 %v17
    %198 = vmatprep.subr.mxu0 0.0
    %199 = vmatpush1.msra.mxu0 %v18
    %200 = vmatprep.subr.mxu0 0.0
    %201 = vmatpush1.msra.mxu0 %v19
    %202 = vmatprep.subr.mxu0 0.0
    %203 = vmatpush1.msra.mxu0 %v20
    %204 = vmatprep.subr.mxu0 0.0
    %205 = vmatpush1.msra.mxu0 %v21
    %206 = vmatprep.subr.mxu0 0.0
    %207 = vmatpush1.msra.mxu0 %v22
    %208 = vmatprep.subr.mxu0 0.0
    %209 = vmatpush1.msra.mxu0 %v23
    %210 = vmatprep.subr.mxu0 0.0
    %211 = vmatpush1.msra.mxu0 %v24
    %212 = vmatprep.subr.mxu0 0.0
    %213 = vmatpush1.msra.mxu0 %v25
    %214 = vmatprep.subr.mxu0 0.0
    %215 = vmatpush1.msra.mxu0 %v26
    %216 = vmatprep.subr.mxu0 0.0
    %217 = vmatpush1.msra.mxu0 %v27
    %218 = vmatprep.subr.mxu0 0.0
    %219 = vmatpush1.msra.mxu0 %v28
    %220 = vmatprep.subr.mxu0 0.0
    %221 = vmatpush1.msra.mxu0 %v29
    %222 = vmatprep.subr.mxu0 0.0
    %223 = vmatpush1.msra.mxu0 %v30
    %224 = vmatprep.subr.mxu0 0.0
    %225 = vmatpush1.msra.mxu0 %v31
    %226 = vmatprep.subr.mxu0 0.0
    %227 = vmatpush1.msra.mxu0 %v32
    %228 = vmatprep.subr.mxu0 0.0
    %229 = vmatpush1.msra.mxu0 %v33
    %230 = vmatprep.subr.mxu0 0.0
    %231 = vmatpush1.msra.mxu0 %v34
    %232 = vmatprep.subr.mxu0 0.0
    %233 = vmatpush1.msra.mxu0 %v35
    %234 = vmatprep.subr.mxu0 0.0
    %235 = vmatpush1.msra.mxu0 %v36
    %236 = vmatprep.subr.mxu0 0.0
    %237 = vmatpush1.msra.mxu0 %v37
    %238 = vmatprep.subr.mxu0 0.0
    %239 = vmatpush1.msra.mxu0 %v38
    %240 = vmatprep.subr.mxu0 0.0
    %241 = vmatpush1.msra.mxu0 %v39
    %242 = vmatprep.subr.mxu0 0.0
    %243 = vmatpush1.msra.mxu0 %v40
    %244 = vmatprep.subr.mxu0 0.0
    %245 = vmatpush1.msra.mxu0 %v41
    %246 = vmatprep.subr.mxu0 0.0
    %247 = vmatpush1.msra.mxu0 %v42
    %248 = vmatprep.subr.mxu0 0.0
    %249 = vmatpush1.msra.mxu0 %v43
    %250 = vmatprep.subr.mxu0 0.0
    %251 = vmatpush1.msra.mxu0 %v44
    %252 = vmatprep.subr.mxu0 0.0
    %253 = vmatpush1.msra.mxu0 %v45
    %254 = vmatprep.subr.mxu0 0.0
    %255 = vmatpush1.msra.mxu0 %v46
    %256 = vmatprep.subr.mxu0 0.0
    %257 = vmatpush1.msra.mxu0 %v47
    %258 = vmatprep.subr.mxu0 0.0
    %259 = vmatpush1.msra.mxu0 %v48
    %260 = vmatprep.mubr.f32.mxu0 %v169
    %261 = vmatmul.mubr.f32.gmra.mrb[0].mxu0 %v161
    %v262 = vpop.f32.mrb[0].mxu0
    %v263 = vadd.f32 %v150, %v262
    %v264 = vpop.f32.mrb[0].mxu0
    %265 = vdwg.mxu0
    %266 = vmatprep.subr.mxu0 0.0
    %267 = vmatpush1.msra.mxu0 %v49
    %268 = vmatprep.subr.mxu0 0.0
    %269 = vmatpush1.msra.mxu0 %v50
    %270 = vmatprep.subr.mxu0 0.0
    %271 = vmatpush1.msra.mxu0 %v51
    %272 = vmatprep.subr.mxu0 0.0
    %273 = vmatpush1.msra.mxu0 %v52
    %274 = vmatprep.subr.mxu0 0.0
    %275 = vmatpush1.msra.mxu0 %v53
    %276 = vmatprep.subr.mxu0 0.0
    %277 = vmatpush1.msra.mxu0 %v54
    %278 = vmatprep.subr.mxu0 0.0
    %279 = vmatpush1.msra.mxu0 %v55
    %280 = vmatprep.subr.mxu0 0.0
    %281 = vmatpush1.msra.mxu0 %v56
    %282 = vmatprep.subr.mxu0 0.0
    %283 = vmatpush1.msra.mxu0 %v57
    %284 = vmatprep.subr.mxu0 0.0
    %285 = vmatpush1.msra.mxu0 %v58
    %286 = vmatprep.subr.mxu0 0.0
    %287 = vmatpush1.msra.mxu0 %v59
    %288 = vmatprep.subr.mxu0 0.0
    %289 = vmatpush1.msra.mxu0 %v60
    %290 = vmatprep.subr.mxu0 0.0
    %291 = vmatpush1.msra.mxu0 %v61
    %292 = vmatprep.subr.mxu0 0.0
    %293 = vmatpush1.msra.mxu0 %v62
    %294 = vmatprep.subr.mxu0 0.0
    %295 = vmatpush1.msra.mxu0 %v63
    %296 = vmatprep.subr.mxu0 0.0
    %297 = vmatpush1.msra.mxu0 %v64
    %298 = vmatprep.subr.mxu0 0.0
    %299 = vmatpush1.msra.mxu0 %v65
    %300 = vmatprep.subr.mxu0 0.0
    %301 = vmatpush1.msra.mxu0 %v66
    %302 = vmatprep.subr.mxu0 0.0
    %303 = vmatpush1.msra.mxu0 %v67
    %304 = vmatprep.subr.mxu0 0.0
    %305 = vmatpush1.msra.mxu0 %v68
    %306 = vmatprep.subr.mxu0 0.0
    %307 = vmatpush1.msra.mxu0 %v69
    %308 = vmatprep.subr.mxu0 0.0
    %309 = vmatpush1.msra.mxu0 %v70
    %310 = vmatprep.subr.mxu0 0.0
    %311 = vmatpush1.msra.mxu0 %v71
    %312 = vmatprep.subr.mxu0 0.0
    %313 = vmatpush1.msra.mxu0 %v72
    %314 = vmatprep.subr.mxu0 0.0
    %315 = vmatpush1.msra.mxu0 %v73
    %316 = vmatprep.subr.mxu0 0.0
    %317 = vmatpush1.msra.mxu0 %v74
    %318 = vmatprep.subr.mxu0 0.0
    %319 = vmatpush1.msra.mxu0 %v75
    %320 = vmatprep.subr.mxu0 0.0
    %321 = vmatpush1.msra.mxu0 %v76
    %322 = vmatprep.subr.mxu0 0.0
    %323 = vmatpush1.msra.mxu0 %v77
    %324 = vmatprep.subr.mxu0 0.0
    %325 = vmatpush1.msra.mxu0 %v78
    %326 = vmatprep.subr.mxu0 0.0
    %327 = vmatpush1.msra.mxu0 %v79
    %328 = vmatprep.subr.mxu0 0.0
    %329 = vmatpush1.msra.mxu0 %v80
    %330 = vmatprep.mubr.f32.mxu0 %v170
    %331 = vmatmul.mubr.f32.gmra.mrb[0].mxu0 %v168
    %v332 = vpop.f32.mrb[0].mxu0
    %v333 = vadd.f32 %v263, %v332
    %v334 = vpop.f32.mrb[0].mxu0
    %335 = vdwg.mxu0
    %336 = vmatprep.subr.mxu0 0.0
    %337 = vmatpush1.msra.mxu0 %v81
    %338 = vmatprep.subr.mxu0 0.0
    %339 = vmatpush1.msra.mxu0 %v82
    %340 = vmatprep.subr.mxu0 0.0
    %341 = vmatpush1.msra.mxu0 %v83
    %342 = vmatprep.subr.mxu0 0.0
    %343 = vmatpush1.msra.mxu0 %v84
    %344 = vmatprep.subr.mxu0 0.0
    %345 = vmatpush1.msra.mxu0 %v85
    %346 = vmatprep.subr.mxu0 0.0
    %347 = vmatpush1.msra.mxu0 %v86
    %348 = vmatprep.subr.mxu0 0.0
    %349 = vmatpush1.msra.mxu0 %v87
    %350 = vmatprep.subr.mxu0 0.0
    %351 = vmatpush1.msra.mxu0 %v88
    %352 = vmatprep.subr.mxu0 0.0
    %353 = vmatpush1.msra.mxu0 %v89
    %354 = vmatprep.subr.mxu0 0.0
    %355 = vmatpush1.msra.mxu0 %v90
    %356 = vmatprep.subr.mxu0 0.0
    %357 = vmatpush1.msra.mxu0 %v91
    %358 = vmatprep.subr.mxu0 0.0
    %359 = vmatpush1.msra.mxu0 %v92
    %360 = vmatprep.subr.mxu0 0.0
    %361 = vmatpush1.msra.mxu0 %v93
    %362 = vmatprep.subr.mxu0 0.0
    %363 = vmatpush1.msra.mxu0 %v94
    %364 = vmatprep.subr.mxu0 0.0
    %365 = vmatpush1.msra.mxu0 %v95
    %366 = vmatprep.subr.mxu0 0.0
    %367 = vmatpush1.msra.mxu0 %v96
    %368 = vmatprep.subr.mxu0 0.0
    %369 = vmatpush1.msra.mxu0 %v97
    %370 = vmatprep.subr.mxu0 0.0
    %371 = vmatpush1.msra.mxu0 %v98
    %372 = vmatprep.subr.mxu0 0.0
    %373 = vmatpush1.msra.mxu0 %v99
    %374 = vmatprep.subr.mxu0 0.0
    %375 = vmatpush1.msra.mxu0 %v100
    %376 = vmatprep.subr.mxu0 0.0
    %377 = vmatpush1.msra.mxu0 %v101
    %378 = vmatprep.subr.mxu0 0.0
    %379 = vmatpush1.msra.mxu0 %v102
    %380 = vmatprep.subr.mxu0 0.0
    %381 = vmatpush1.msra.mxu0 %v103
    %382 = vmatprep.subr.mxu0 0.0
    %383 = vmatpush1.msra.mxu0 %v104
    %384 = vmatprep.subr.mxu0 0.0
    %385 = vmatpush1.msra.mxu0 %v105
    %386 = vmatprep.subr.mxu0 0.0
    %387 = vmatpush1.msra.mxu0 %v106
    %388 = vmatprep.subr.mxu0 0.0
    %389 = vmatpush1.msra.mxu0 %v107
    %390 = vmatprep.subr.mxu0 0.0
    %391 = vmatpush1.msra.mxu0 %v108
    %392 = vmatprep.subr.mxu0 0.0
    %393 = vmatpush1.msra.mxu0 %v109
    %394 = vmatprep.subr.mxu0 0.0
    %395 = vmatpush1.msra.mxu0 %v110
    %396 = vmatprep.subr.mxu0 0.0
    %397 = vmatpush1.msra.mxu0 %v111
    %398 = vmatprep.subr.mxu0 0.0
    %399 = vmatpush1.msra.mxu0 %v112
    %400 = vmatprep.mubr.f32.mxu0 %v186
    %401 = vmatmul.mubr.f32.gmra.mrb[0].mxu0 %v178
    %v402 = vpop.f32.mrb[0].mxu0
    %v403 = vadd.f32 %v333, %v402
    %v404 = vpop.f32.mrb[0].mxu0
    %405 = vdwg.mxu0
    %406 = vmatprep.subr.mxu0 0.0
    %407 = vmatpush1.msra.mxu0 %v113
    %408 = vmatprep.subr.mxu0 0.0
    %409 = vmatpush1.msra.mxu0 %v114
    %410 = vmatprep.subr.mxu0 0.0
    %411 = vmatpush1.msra.mxu0 %v115
    %412 = vmatprep.subr.mxu0 0.0
    %413 = vmatpush1.msra.mxu0 %v116
    %414 = vmatprep.subr.mxu0 0.0
    %415 = vmatpush1.msra.mxu0 %v117
    %416 = vmatprep.subr.mxu0 0.0
    %417 = vmatpush1.msra.mxu0 %v118
    %418 = vmatprep.subr.mxu0 0.0
    %419 = vmatpush1.msra.mxu0 %v119
    %420 = vmatprep.subr.mxu0 0.0
    %421 = vmatpush1.msra.mxu0 %v120
    %422 = vmatprep.subr.mxu0 0.0
    %423 = vmatpush1.msra.mxu0 %v121
    %424 = vmatprep.subr.mxu0 0.0
    %425 = vmatpush1.msra.mxu0 %v122
    %426 = vmatprep.subr.mxu0 0.0
    %427 = vmatpush1.msra.mxu0 %v123
    %428 = vmatprep.subr.mxu0 0.0
    %429 = vmatpush1.msra.mxu0 %v124
    %430 = vmatprep.subr.mxu0 0.0
    %431 = vmatpush1.msra.mxu0 %v125
    %432 = vmatprep.subr.mxu0 0.0
    %433 = vmatpush1.msra.mxu0 %v126
    %434 = vmatprep.subr.mxu0 0.0
    %435 = vmatpush1.msra.mxu0 %v127
    %436 = vmatprep.subr.mxu0 0.0
    %437 = vmatpush1.msra.mxu0 %v128
    %438 = vmatprep.subr.mxu0 0.0
    %439 = vmatpush1.msra.mxu0 %v129
    %440 = vmatprep.subr.mxu0 0.0
    %441 = vmatpush1.msra.mxu0 %v130
    %442 = vmatprep.subr.mxu0 0.0
    %443 = vmatpush1.msra.mxu0 %v131
    %444 = vmatprep.subr.mxu0 0.0
    %445 = vmatpush1.msra.mxu0 %v132
    %446 = vmatprep.subr.mxu0 0.0
    %447 = vmatpush1.msra.mxu0 %v133
    %448 = vmatprep.subr.mxu0 0.0
    %449 = vmatpush1.msra.mxu0 %v134
    %450 = vmatprep.subr.mxu0 0.0
    %451 = vmatpush1.msra.mxu0 %v135
    %452 = vmatprep.subr.mxu0 0.0
    %453 = vmatpush1.msra.mxu0 %v136
    %454 = vmatprep.subr.mxu0 0.0
    %455 = vmatpush1.msra.mxu0 %v137
    %456 = vmatprep.subr.mxu0 0.0
    %457 = vmatpush1.msra.mxu0 %v138
    %458 = vmatprep.subr.mxu0 0.0
    %459 = vmatpush1.msra.mxu0 %v139
    %460 = vmatprep.subr.mxu0 0.0
    %461 = vmatpush1.msra.mxu0 %v140
    %462 = vmatprep.subr.mxu0 0.0
    %463 = vmatpush1.msra.mxu0 %v141
    %464 = vmatprep.subr.mxu0 0.0
    %465 = vmatpush1.msra.mxu0 %v142
    %466 = vmatprep.subr.mxu0 0.0
    %467 = vmatpush1.msra.mxu0 %v143
    %468 = vmatprep.subr.mxu0 0.0
    %469 = vmatpush1.msra.mxu0 %v144
    %470 = vmatprep.mubr.f32.mxu0 %v187
    %471 = vmatmul.mubr.f32.gmra.mrb[0].mxu0 %v185
    %v472 = vpop.f32.mrb[0].mxu0
    %v473 = vadd.f32 %v403, %v472
    %v474 = vpop.f32.mrb[0].mxu0
    %475 = vdwg.mxu0
    %v476 = vmul.f32 %v473, 0.5
    %v477 = vmul.f32 %v473, 0.16666667
    %v478 = vmul.f32 %v473, 0.3
    %480 = vrot.lane.b32.xlu0 %v478, 116
    %v481 = vpop.permute.xlu0 %480
    %v483 = vadd.f32 %v476, %v481
    %v484 = vmul.f32 %v473, 0.33333334
    %486 = vrot.lane.b32.xlu0 %v484, 116
    %v487 = vpop.permute.xlu0 %486
    %v489 = vadd.f32 %v477, %v487
    %v490 = vmul.f32 %v473, 0.2
    %492 = vrot.lane.b32.xlu0 %v490, 104
    %v493 = vpop.permute.xlu0 %492
    %v495 = vadd.f32 %v483, %v493
    %497 = vrot.lane.b32.xlu0 %v476, 104
    %v498 = vpop.permute.xlu0 %497
    %v500 = vadd.f32 %v489, %v498
    %vm501 = vcmask 64512
    %v502 = vsel %vm501, %v495, %v500
    %vm503 = vcmask 91136
    %504 = vst.msk [vmem:[#allocation2] sm:$0x3] %vm503, %v502
    // Predicated region
    $region14: #{tpu_custom_call.1} parent=1 // pred_check
      _
    $region15: #{tpu_custom_call.1} parent=1 // pred_check_branch
      %506 = sbr.rel (0) target = $region17
    $region16: #{tpu_custom_call.1} parent=1 // pred_region
      %s508 = ssub.s32 32, 32
      %509 = vsyncadd [#allocation3], %s508
      %s511 = sshll.u32 [#allocation2], 4
      %s512 = int_to_ptr.vmem [resolvable:$true] %s511
      %514 = dma.vmem_to_hbm [thread:$0]  %s512, 32, %s3, [#allocation3]
    $region17: #{tpu_custom_call.1} parent=1 // pred_fallthru
      _
    // Predicated region
    $region18: #{tpu_custom_call.1} parent=1 // pred_check
      _
    $region19: #{tpu_custom_call.1} parent=1 // pred_check_branch
      %516 = sbr.rel (0) target = $region21
    $region20: #{tpu_custom_call.1} parent=1 // pred_region
      %517 = dma.done [#allocation3], 32
    $region21: #{tpu_custom_call.1} parent=1 // pred_fallthru
      _
    %518 = vsyncpa [#allocation3], 1

</llo_original>
